<compile_context>
chip_gen: v7x
topology: tpu7x:2x2x1
jax: 0.10.0
libtpu: 0.0.40
codegen_flags: <defaults>
</compile_context>

<pallas_src>
import functools

import jax
import jax.numpy as jnp
from jax import lax
from jax.experimental import pallas as pl
from jax.experimental.pallas import tpu as pltpu


def _round_up(a, b):
    return (a + b - 1) // b * b


def _lorentz_objective_kernel(x_ref, t_ref, out_ref, acc_ref, *,
                              tiles_per_split):
    i = pl.program_id(1)          # reduction step within the split

    @pl.when(i == 0)
    def _():
        acc_ref[...] = jnp.zeros_like(acc_ref)

    # x_ref is (8, D): Minkowski-flipped x ([x0, -x1, ..., -xd]) replicated
    # over 8 sublanes so the MXU LHS tile is well formed.  The contraction is
    # the canonical (8, D) x (D, TILE_N) -> (8, TILE_N); because the metric is
    # folded into x, the result directly equals  u = -<x, y>_L.
    prods = lax.dot_general(
        x_ref[...], t_ref[...],
        dimension_numbers=(((1,), (0,)), ((), ())),
        precision=lax.Precision.HIGHEST,
        preferred_element_type=jnp.float32)
    u = prods[0:1, :]                                   # lane-dense (1, TILE_N)

    # arccosh(u) = log(u + sqrt((u-1)(u+1))); the (u-1)(u+1) form avoids the
    # catastrophic cancellation of u*u - 1 near u == 1.  Zero-padded target
    # columns give u == 0 exactly -> clamped to 1 -> distance 0, so no tail
    # mask is needed anywhere.
    u = jnp.maximum(u, 1.0)
    dist = jnp.log(u + jnp.sqrt((u - 1.0) * (u + 1.0)))  # (1, TILE_N)

    # Lane-wise accumulation (no cross-lane reduce on the per-step path).
    acc_ref[...] += dist

    # Single XLU cross-lane reduce + output store, once per split.
    @pl.when(i == tiles_per_split - 1)
    def _():
        out_ref[...] = jnp.zeros_like(out_ref) + jnp.sum(acc_ref[...])


def model_forward(x, targets, *, tile_n=16384, num_splits=1):
    """Replicates Model.forward: returns (loss, difference).

    objective(x) = mean Lorentz geodesic distance from x to `targets` (N, D).

    num_splits=1 is right for v5e/v6e (single TensorCore); on v7x use
    num_splits=2 so the leading "parallel" grid axis can land on both cores.
    """
    x = x.reshape(-1).astype(jnp.float32)
    targets = targets.astype(jnp.float32)
    n, d = targets.shape

    # Grid geometry (static Python ints).  tile_n is the lane dimension of the
    # transposed (D, N) layout, so it must be a multiple of 128.
    tile_n = max(128, min(_round_up(tile_n, 128), _round_up(n, 128)))
    tiles_total = pl.cdiv(n, tile_n)
    num_splits = max(1, min(num_splits, tiles_total))
    tiles_per_split = pl.cdiv(tiles_total, num_splits)
    n_pad = num_splits * tiles_per_split * tile_n

    # One-time layout prep: zero-pad along N and transpose to a lane-dense
    # (D, N_pad) slab (contiguous DMAs, no lane padding in VMEM, natural MXU
    # RHS orientation).  For repeated calls with the same targets this prep
    # should be cached / hoisted by the caller.
    if n_pad != n:
        targets = jnp.pad(targets, ((0, n_pad - n), (0, 0)))
    targets_t = targets.T                                # (D, n_pad)

    # Fold the Minkowski metric into x once and replicate over 8 sublanes.
    signs = jnp.full((d,), -1.0, jnp.float32).at[0].set(1.0)
    x8 = jnp.broadcast_to((x * signs)[None, :], (8, d))

    kernel = functools.partial(_lorentz_objective_kernel,
                               tiles_per_split=tiles_per_split)

    partial_sums = pl.pallas_call(
        kernel,
        grid=(num_splits, tiles_per_split),
        in_specs=[
            # x: single resident block.
            pl.BlockSpec((8, d), lambda c, i: (0, 0)),
            # targets: streamed (double-buffered) lane-dense column tiles.
            pl.BlockSpec((d, tile_n),
                         lambda c, i, _t=tiles_per_split: (0, c * _t + i)),
        ],
        # Per-split accumulator block; only element [c, 0, 0] is consumed.
        out_specs=pl.BlockSpec((1, 8, 128), lambda c, i: (c, 0, 0)),
        out_shape=jax.ShapeDtypeStruct((num_splits, 8, 128), jnp.float32),
        scratch_shapes=[pltpu.VMEM((1, tile_n), jnp.float32)],
        compiler_params=pltpu.CompilerParams(
            dimension_semantics=("parallel", "arbitrary"),
            vmem_limit_bytes=32 * 1024 * 1024,
        ),
        cost_estimate=pl.CostEstimate(
            flops=2 * 8 * d * n_pad,
            transcendentals=2 * n_pad,
            bytes_accessed=n_pad * d * 4 + 8 * d * 4
                           + num_splits * 8 * 128 * 4,
        ),
    )(x8, targets_t)

    difference = jnp.sum(partial_sums[:, 0, 0]) / jnp.float32(n)
    loss = difference              # Model.forward: loss = difference
    return loss, difference


def make_lorentz_parameter(parameter_size):
    """Deterministic init matching the PyTorch __init__: [1, 0, ..., 0]."""
    d = parameter_size + 1
    x = jnp.zeros((d,), dtype=jnp.float32)
    x = x.at[0].set(1.0)
    return x


def make_lorentz_targets(key, n, d):
    """Random points on the Lorentz hyperboloid: y0 = sqrt(1 + ||v||^2)."""
    v = 0.1 * jax.random.normal(key, (n, d - 1), dtype=jnp.float32)
    y0 = jnp.sqrt(1.0 + jnp.sum(v * v, axis=-1, keepdims=True))
    return jnp.concatenate([y0, v], axis=-1)


def _ref_objective(xv, tv):
    """Pure-JAX reference (independent arccosh formulation)."""
    signs = jnp.ones((xv.shape[0],), jnp.float32).at[0].set(-1.0)
    inner = tv @ (signs * xv)
    u = jnp.maximum(-inner, 1.0)
    return jnp.mean(jnp.arccosh(u))


if __name__ == "__main__":
    parameter_size = 31          # ambient dim D = 32
    key = jax.random.PRNGKey(0)
    k1, k2 = jax.random.split(key)

    x = make_lorentz_parameter(parameter_size)                       # (32,)

    # Small case matching the module's toy usage: single 128-wide tile.
    tgt_small = make_lorentz_targets(k1, 8, parameter_size + 1)      # (8, 32)
    loss_s, diff_s = jax.jit(model_forward)(x, tgt_small)
    jax.block_until_ready((loss_s, diff_s))

    # Case exercising multi-tile accumulation, the 2-way split and the
    # zero-padded tail: N = 300 -> 512 padded columns, grid = (2, 2).
    tgt_big = make_lorentz_targets(k2, 300, parameter_size + 1)      # (300, 32)
    fwd_big = jax.jit(functools.partial(model_forward, tile_n=128, num_splits=2))
    loss_b, diff_b = fwd_big(x, tgt_big)
    jax.block_until_ready((loss_b, diff_b))

    # Default (production) tile config on the same data: tile_n clamps to the
    # padded N, grid = (1, 1).
    loss_d, diff_d = jax.jit(model_forward)(x, tgt_big)
    jax.block_until_ready((loss_d, diff_d))

    ref_s = _ref_objective(x, tgt_small)
    ref_b = _ref_objective(x, tgt_big)

    assert jnp.allclose(loss_s, ref_s, rtol=1e-3, atol=1e-5), (loss_s, ref_s)
    assert jnp.allclose(diff_s, loss_s)
    assert jnp.allclose(loss_b, ref_b, rtol=1e-3, atol=1e-5), (loss_b, ref_b)
    assert jnp.allclose(diff_b, loss_b)
    assert jnp.allclose(loss_d, ref_b, rtol=1e-3, atol=1e-5), (loss_d, ref_b)
    assert jnp.allclose(diff_d, loss_d)

    print("KERNEL_OK")
</pallas_src>

<mosaic_0001>
module attributes {stable_mosaic.version = 11 : i64} {
  func.func @_lorentz_objective_kernel(%arg0: i32, %arg1: i32, %arg2: memref<8x32xf32, #tpu.memory_space<vmem>>, %arg3: memref<32x128xf32, #tpu.memory_space<vmem>>, %arg4: memref<1x8x128xf32, #tpu.memory_space<vmem>>, %arg5: memref<1x128xf32, #tpu.memory_space<vmem>>) attributes {dimension_semantics = [#tpu.dimension_semantics<parallel>, #tpu.dimension_semantics<arbitrary>], iteration_bounds = array<i64: 1, 1>, scalar_prefetch = 0 : i64, scratch_operands = 1 : i64, tpu.core_type = #tpu.core_type<tc>, window_params = [{pipeline_mode = #tpu.pipeline_mode<synchronous>, transform_indices = @transform_0, window_bounds = array<i64: 8, 32>}, {transform_indices = @transform_1, window_bounds = array<i64: 32, 128>}, {transform_indices = @transform_2, window_bounds = array<i64: 1, 8, 128>}]} {
    %c0_i32 = arith.constant 0 : i32
    %0 = arith.cmpi eq, %arg1, %c0_i32 : i32
    %1 = arith.extui %0 : i1 to i32
    %c0_i32_0 = arith.constant 0 : i32
    %2 = arith.cmpi ne, %1, %c0_i32_0 : i32
    scf.if %2 {
      %cst_13 = arith.constant 0.000000e+00 : f32
      %23 = vector.broadcast %cst_13 : f32 to vector<1x128xf32>
      %c0_14 = arith.constant 0 : index
      %c0_15 = arith.constant 0 : index
      %24 = vector.load %arg5[%c0_14, %c0_15] : memref<1x128xf32, #tpu.memory_space<vmem>>, vector<1x128xf32>
      tpu.vector_store %arg5[%c0_14, %c0_15], %23 {strides = array<i32>} : memref<1x128xf32, #tpu.memory_space<vmem>>, vector<1x128xf32>,
    } else {
    }
    %c0 = arith.constant 0 : index
    %c0_1 = arith.constant 0 : index
    %3 = vector.load %arg2[%c0, %c0_1] : memref<8x32xf32, #tpu.memory_space<vmem>>, vector<8x32xf32>
    %c0_2 = arith.constant 0 : index
    %c0_3 = arith.constant 0 : index
    %4 = vector.load %arg3[%c0_2, %c0_3] : memref<32x128xf32, #tpu.memory_space<vmem>>, vector<32x128xf32>
    %cst = arith.constant dense<0.000000e+00> : vector<8x128xf32>
    %5 = tpu.matmul %3, %4, %cst {dimension_numbers = #tpu.dot_dimension_numbers<[1], [0], [0], [1], [0, 0, 1, 1], [], []>, precision = #tpu.contract_precision<fp32>} : vector<8x32xf32>, vector<32x128xf32>, vector<8x128xf32> -> vector<8x128xf32>
    %6 = vector.extract_strided_slice %5 {offsets = [0, 0], sizes = [1, 128], strides = [1, 1]} : vector<8x128xf32> to vector<1x128xf32>
    %cst_4 = arith.constant 1.000000e+00 : f32
    %7 = vector.broadcast %cst_4 : f32 to vector<1x128xf32>
    %8 = arith.maximumf %6, %7 : vector<1x128xf32>
    %cst_5 = arith.constant 1.000000e+00 : f32
    %9 = vector.broadcast %cst_5 : f32 to vector<1x128xf32>
    %10 = arith.subf %8, %9 : vector<1x128xf32>
    %cst_6 = arith.constant 1.000000e+00 : f32
    %11 = vector.broadcast %cst_6 : f32 to vector<1x128xf32>
    %12 = arith.addf %8, %11 : vector<1x128xf32>
    %13 = arith.mulf %10, %12 : vector<1x128xf32>
    %14 = math.sqrt %13 : vector<1x128xf32>
    %15 = arith.addf %8, %14 : vector<1x128xf32>
    %16 = math.log %15 : vector<1x128xf32>
    %c0_7 = arith.constant 0 : index
    %c0_8 = arith.constant 0 : index
    %17 = vector.load %arg5[%c0_7, %c0_8] : memref<1x128xf32, #tpu.memory_space<vmem>>, vector<1x128xf32>
    %18 = arith.addf %17, %16 : vector<1x128xf32>
    %c0_9 = arith.constant 0 : index
    %c0_10 = arith.constant 0 : index
    %19 = vector.load %arg5[%c0_9, %c0_10] : memref<1x128xf32, #tpu.memory_space<vmem>>, vector<1x128xf32>
    tpu.vector_store %arg5[%c0_9, %c0_10], %18 {strides = array<i32>} : memref<1x128xf32, #tpu.memory_space<vmem>>, vector<1x128xf32>,
    %c0_i32_11 = arith.constant 0 : i32
    %20 = arith.cmpi eq, %arg1, %c0_i32_11 : i32
    %21 = arith.extui %20 : i1 to i32
    %c0_i32_12 = arith.constant 0 : i32
    %22 = arith.cmpi ne, %21, %c0_i32_12 : i32
    scf.if %22 {
      %cst_13 = arith.constant 0.000000e+00 : f32
      %23 = vector.broadcast %cst_13 : f32 to vector<1x8x128xf32>
      %c0_14 = arith.constant 0 : index
      %c0_15 = arith.constant 0 : index
      %24 = vector.load %arg5[%c0_14, %c0_15] : memref<1x128xf32, #tpu.memory_space<vmem>>, vector<1x128xf32>
      %25 = vector.shape_cast %24 : vector<1x128xf32> to vector<1x1x128xf32>
      %cst_16 = arith.constant dense<0.000000e+00> : vector<1xf32>
      %26 = vector.multi_reduction <add>, %25, %cst_16 [1, 2] : vector<1x1x128xf32> to vector<1xf32>
      %27 = vector.shape_cast %26 : vector<1xf32> to vector<1x1x1xf32>
      %28 = vector.extract %27[0, 0, 0] : f32 from vector<1x1x1xf32>
      %29 = vector.broadcast %28 : f32 to vector<1x8x128xf32>
      %30 = arith.addf %23, %29 : vector<1x8x128xf32>
      %c0_17 = arith.constant 0 : index
      %c0_18 = arith.constant 0 : index
      %c0_19 = arith.constant 0 : index
      %31 = vector.load %arg4[%c0_17, %c0_18, %c0_19] : memref<1x8x128xf32, #tpu.memory_space<vmem>>, vector<1x8x128xf32>
      tpu.vector_store %arg4[%c0_17, %c0_18, %c0_19], %30 {strides = array<i32>} : memref<1x8x128xf32, #tpu.memory_space<vmem>>, vector<1x8x128xf32>,
    } else {
    }
    return
  }
  func.func @transform_0(%arg0: i32, %arg1: i32) -> (i32, i32) {
    %c0_i32 = arith.constant 0 : i32
    %c0_i32_0 = arith.constant 0 : i32
    %c0_i32_1 = arith.constant 0 : i32
    return %c0_i32, %c0_i32_0 : i32, i32
  }
  func.func @transform_1(%arg0: i32, %arg1: i32) -> (i32, i32) {
    %c1_i32 = arith.constant 1 : i32
    %0 = arith.muli %arg0, %c1_i32 : i32
    %1 = arith.addi %0, %arg1 : i32
    %c0_i32 = arith.constant 0 : i32
    %c0_i32_0 = arith.constant 0 : i32
    return %c0_i32, %1 : i32, i32
  }
  func.func @transform_2(%arg0: i32, %arg1: i32) -> (i32, i32, i32) {
    %c0_i32 = arith.constant 0 : i32
    %c0_i32_0 = arith.constant 0 : i32
    %c0_i32_1 = arith.constant 0 : i32
    return %arg0, %c0_i32, %c0_i32_0 : i32, i32, i32
  }
}

</mosaic_0001>

<llo_original>
// kernel: mul.1
$region0: #{mul.1}
  #allocation0 [shape = 's32[1]{0}', space=sflag, size = 0x4, scoped, tag = 'scoped memory for mul.1']
  %s0 = inlined_call_operand.vmem [shape: f32[32], index: 0, kind: input, shape index: {}]
  %s1 = inlined_call_operand.vmem [shape: f32[32], index: 1, kind: input, shape index: {}]
  %s2 = inlined_call_operand.vmem [shape: f32[32], index: 2, kind: output, shape index: {}]
  %v3 = vld [vmem:[%s0] sm:$0x1]
  %v4 = vld [vmem:[%s1] sm:$0x1]
  %5 = xla_tuple %v3, %v4
  %6 = xla_tuple %5
  %v7 = vmul.f32 %v3, %v4
  %8 = xla_tuple %v7
  %9 = vst [vmem:[%s2] sm:$0x1] %v7

// kernel: model_forward.1
$region0: #{model_forward.1}
  #allocation0 [shape = 'u32[]', space=smem, size = 0x4, offset = 0x4, fixed_abs, tag = 'smem constant byte address 0x4 - core index']
  #allocation1 [shape = 'u32[144,128]{1,0:T(1,128)}', space=vmem, size = 0x12000, scoped, tag = 'internal scratch']
  #allocation2 [shape = 'f32[1,128]{1,0:T(1,128)}', space=vmem, size = 0x200, scoped, tag = 'scratch operand']
  %s0 = inlined_call_operand.vmem [shape: f32[8,32], index: 0, kind: input, shape index: {}]
  %s1 = inlined_call_operand.vmem [shape: f32[32,128], index: 1, kind: input, shape index: {}]
  %s2 = inlined_call_operand.vmem [shape: f32[1,8,128], index: 2, kind: output, shape index: {}]
  %s3 = sld [smem:[#allocation0]]
  $region26: #{model_forward.1} parent=0
    _
  %s5 = ssub.s32 1, %s3
  %s6 = scalar_select 0, %s5, %s3
  // Predicated region
  $region2: #{model_forward.1} parent=0 // pred_check
    _
  $region3: #{model_forward.1} parent=0 // pred_check_branch
    %8 = sbr.rel (0) target = $region5
  $region4: #{model_forward.1} parent=0 // pred_region
    _
  $region5: #{model_forward.1} parent=0 // pred_fallthru
    _
  // Predicated region
  $region6: #{model_forward.1} parent=0 // pred_check
    _
  $region7: #{model_forward.1} parent=0 // pred_check_branch
    %10 = sbr.rel (0) target = $region9
  $region8: #{model_forward.1} parent=0 // pred_region
    %s11 = sadd.s32 0, 0
    %p12 = scmp.lt.s32.totalorder %s11, 0
    %s13 = scalar_select %p12, %s11, 0
    %s14 = smul.addr %s13, 8
    %s15 = scalar_lea.vmem %s1, %s14
    %s16 = sadd.s32 0, 0
  $region9: #{model_forward.1} parent=0 // pred_fallthru
    _
  %s17 = sadd.s32 0, 0
  %p18 = scmp.lt.s32.totalorder %s17, 0
  %s19 = scalar_select %p18, %s17, 0
  %s20 = smul.addr %s19, 8
  %s21 = scalar_lea.vmem %s1, %s20
  %s22 = sadd.s32 0, 0
  %p23 = scmp.lt.s32.totalorder %s22, 0
  %s24 = scalar_select %p23, %s22, 0
  %s25 = smul.addr %s24, 8
  %s26 = scalar_lea.vmem %s1, %s25
  %s27 = sadd.s32 0, 0
  %p28 = scmp.eq.s32.totalorder 0, 0
  // Predicated region
  $region10: #{model_forward.1} parent=0 // pred_check
    %p29 = pneg %p28
  $region11: #{model_forward.1} parent=0 // pred_check_branch
    %31 = sbr.rel (%p29) target = $region13
  $region12: #{model_forward.1} parent=0 // pred_region
    %32 = vst [vmem:[#allocation2] sm:$0x1] 0.0
  $region13: #{model_forward.1} parent=0 // pred_fallthru
    _
  %v33 = vld [vmem:[%s0] sm:$0xff]
  %v34 = vld [vmem:[%s26] sm:$0xff]
  %v35 = vld [vmem:[%s26 + $0x8] sm:$0xff]
  %v36 = vld [vmem:[%s26 + $0x10] sm:$0xff]
  %v37 = vld [vmem:[%s26 + $0x18] sm:$0xff]
  %vm38 = vcmask 261120
  %v40 = vsel %vm38, %v33, 0
  %42 = vmatprep.subr.mxu0 0.0
  %v43 = vand.u32 %v34, 4294901760
  %44 = vmatpush1.msra.mxu0 %v43
  %45 = vmatprep.subr.mxu0 0.0
  %v46 = vand.u32 %v35, 4294901760
  %47 = vmatpush1.msra.mxu0 %v46
  %48 = vmatprep.subr.mxu0 0.0
  %v49 = vand.u32 %v36, 4294901760
  %50 = vmatpush1.msra.mxu0 %v49
  %51 = vmatprep.subr.mxu0 0.0
  %v52 = vand.u32 %v37, 4294901760
  %53 = vmatpush1.msra.mxu0 %v52
  %54 = vmatprep.subr.mxu0 0.0
  %55 = vmatpush1.msra.mxu0 0.0
  %56 = vmatprep.subr.mxu0 0.0
  %57 = vmatpush1.msra.mxu0 0.0
  %58 = vmatprep.subr.mxu0 0.0
  %59 = vmatpush1.msra.mxu0 0.0
  %60 = vmatprep.subr.mxu0 0.0
  %61 = vmatpush1.msra.mxu0 0.0
  %62 = vmatprep.subr.mxu0 0.0
  %63 = vmatpush1.msra.mxu0 0.0
  %64 = vmatprep.subr.mxu0 0.0
  %65 = vmatpush1.msra.mxu0 0.0
  %66 = vmatprep.subr.mxu0 0.0
  %67 = vmatpush1.msra.mxu0 0.0
  %68 = vmatprep.subr.mxu0 0.0
  %69 = vmatpush1.msra.mxu0 0.0
  %70 = vmatprep.subr.mxu0 0.0
  %71 = vmatpush1.msra.mxu0 0.0
  %72 = vmatprep.subr.mxu0 0.0
  %73 = vmatpush1.msra.mxu0 0.0
  %74 = vmatprep.subr.mxu0 0.0
  %75 = vmatpush1.msra.mxu0 0.0
  %76 = vmatprep.subr.mxu0 0.0
  %77 = vmatpush1.msra.mxu0 0.0
  %78 = vmatprep.subr.mxu0 0.0
  %79 = vmatpush1.msra.mxu0 0.0
  %80 = vmatprep.subr.mxu0 0.0
  %81 = vmatpush1.msra.mxu0 0.0
  %82 = vmatprep.subr.mxu0 0.0
  %83 = vmatpush1.msra.mxu0 0.0
  %84 = vmatprep.subr.mxu0 0.0
  %85 = vmatpush1.msra.mxu0 0.0
  %86 = vmatprep.subr.mxu0 0.0
  %87 = vmatpush1.msra.mxu0 0.0
  %88 = vmatprep.subr.mxu0 0.0
  %89 = vmatpush1.msra.mxu0 0.0
  %90 = vmatprep.subr.mxu0 0.0
  %91 = vmatpush1.msra.mxu0 0.0
  %92 = vmatprep.subr.mxu0 0.0
  %93 = vmatpush1.msra.mxu0 0.0
  %94 = vmatprep.subr.mxu0 0.0
  %95 = vmatpush1.msra.mxu0 0.0
  %96 = vmatprep.subr.mxu0 0.0
  %97 = vmatpush1.msra.mxu0 0.0
  %98 = vmatprep.subr.mxu0 0.0
  %99 = vmatpush1.msra.mxu0 0.0
  %100 = vmatprep.subr.mxu0 0.0
  %101 = vmatpush1.msra.mxu0 0.0
  %102 = vmatprep.subr.mxu0 0.0
  %103 = vmatpush1.msra.mxu0 0.0
  %104 = vmatprep.subr.mxu0 0.0
  %105 = vmatpush1.msra.mxu0 0.0
  %106 = vmatprep.subr.mxu0 0.0
  %107 = vmatpush1.msra.mxu0 0.0
  %108 = vmatprep.subr.mxu0 0.0
  %109 = vmatpush1.msra.mxu0 0.0
  %110 = vmatprep.mubr.f32.mxu0 0.0
  %v111 = vand.u32 %v40, 4294901760
  %v112 = vsub.f32 %v40, %v111
  %v113 = vand.u32 %v112, 4294901760
  %v114 = vsub.f32 %v112, %v113
  %v115 = vand.u32 %v114, 4294901760
  %116 = vmatmul.mubr.f32.gmra.mrb[0].mxu0 %v115
  %v117 = vpop.f32.mrb[0].mxu0
  %v118 = vadd.f32 0.0, %v117
  %v119 = vpop.f32.mrb[0].mxu0
  %120 = vdwg.mxu0
  %121 = vmatprep.subr.mxu0 0.0
  %v122 = vand.u32 %v34, 4294901760
  %v123 = vsub.f32 %v34, %v122
  %v124 = vand.u32 %v123, 4294901760
  %v125 = vsub.f32 %v123, %v124
  %v126 = vand.u32 %v125, 4294901760
  %127 = vmatpush1.msra.mxu0 %v126
  %128 = vmatprep.subr.mxu0 0.0
  %v129 = vand.u32 %v35, 4294901760
  %v130 = vsub.f32 %v35, %v129
  %v131 = vand.u32 %v130, 4294901760
  %v132 = vsub.f32 %v130, %v131
  %v133 = vand.u32 %v132, 4294901760
  %134 = vmatpush1.msra.mxu0 %v133
  %135 = vmatprep.subr.mxu0 0.0
  %v136 = vand.u32 %v36, 4294901760
  %v137 = vsub.f32 %v36, %v136
  %v138 = vand.u32 %v137, 4294901760
  %v139 = vsub.f32 %v137, %v138
  %v140 = vand.u32 %v139, 4294901760
  %141 = vmatpush1.msra.mxu0 %v140
  %142 = vmatprep.subr.mxu0 0.0
  %v143 = vand.u32 %v37, 4294901760
  %v144 = vsub.f32 %v37, %v143
  %v145 = vand.u32 %v144, 4294901760
  %v146 = vsub.f32 %v144, %v145
  %v147 = vand.u32 %v146, 4294901760
  %148 = vmatpush1.msra.mxu0 %v147
  %149 = vmatprep.subr.mxu0 0.0
  %150 = vmatpush1.msra.mxu0 0.0
  %151 = vmatprep.subr.mxu0 0.0
  %152 = vmatpush1.msra.mxu0 0.0
  %153 = vmatprep.subr.mxu0 0.0
  %154 = vmatpush1.msra.mxu0 0.0
  %155 = vmatprep.subr.mxu0 0.0
  %156 = vmatpush1.msra.mxu0 0.0
  %157 = vmatprep.subr.mxu0 0.0
  %158 = vmatpush1.msra.mxu0 0.0
  %159 = vmatprep.subr.mxu0 0.0
  %160 = vmatpush1.msra.mxu0 0.0
  %161 = vmatprep.subr.mxu0 0.0
  %162 = vmatpush1.msra.mxu0 0.0
  %163 = vmatprep.subr.mxu0 0.0
  %164 = vmatpush1.msra.mxu0 0.0
  %165 = vmatprep.subr.mxu0 0.0
  %166 = vmatpush1.msra.mxu0 0.0
  %167 = vmatprep.subr.mxu0 0.0
  %168 = vmatpush1.msra.mxu0 0.0
  %169 = vmatprep.subr.mxu0 0.0
  %170 = vmatpush1.msra.mxu0 0.0
  %171 = vmatprep.subr.mxu0 0.0
  %172 = vmatpush1.msra.mxu0 0.0
  %173 = vmatprep.subr.mxu0 0.0
  %174 = vmatpush1.msra.mxu0 0.0
  %175 = vmatprep.subr.mxu0 0.0
  %176 = vmatpush1.msra.mxu0 0.0
  %177 = vmatprep.subr.mxu0 0.0
  %178 = vmatpush1.msra.mxu0 0.0
  %179 = vmatprep.subr.mxu0 0.0
  %180 = vmatpush1.msra.mxu0 0.0
  %181 = vmatprep.subr.mxu0 0.0
  %182 = vmatpush1.msra.mxu0 0.0
  %183 = vmatprep.subr.mxu0 0.0
  %184 = vmatpush1.msra.mxu0 0.0
  %185 = vmatprep.subr.mxu0 0.0
  %186 = vmatpush1.msra.mxu0 0.0
  %187 = vmatprep.subr.mxu0 0.0
  %188 = vmatpush1.msra.mxu0 0.0
  %189 = vmatprep.subr.mxu0 0.0
  %190 = vmatpush1.msra.mxu0 0.0
  %191 = vmatprep.subr.mxu0 0.0
  %192 = vmatpush1.msra.mxu0 0.0
  %193 = vmatprep.subr.mxu0 0.0
  %194 = vmatpush1.msra.mxu0 0.0
  %195 = vmatprep.subr.mxu0 0.0
  %196 = vmatpush1.msra.mxu0 0.0
  %197 = vmatprep.subr.mxu0 0.0
  %198 = vmatpush1.msra.mxu0 0.0
  %199 = vmatprep.subr.mxu0 0.0
  %200 = vmatpush1.msra.mxu0 0.0
  %201 = vmatprep.subr.mxu0 0.0
  %202 = vmatpush1.msra.mxu0 0.0
  %203 = vmatprep.subr.mxu0 0.0
  %204 = vmatpush1.msra.mxu0 0.0
  %205 = vmatprep.mubr.f32.mxu0 0.0
  %v206 = vand.u32 %v40, 4294901760
  %207 = vmatmul.mubr.f32.gmra.mrb[0].mxu0 %v206
  %v208 = vpop.f32.mrb[0].mxu0
  %v209 = vadd.f32 %v118, %v208
  %v210 = vpop.f32.mrb[0].mxu0
  %211 = vdwg.mxu0
  %212 = vmatprep.subr.mxu0 0.0
  %v213 = vand.u32 %v34, 4294901760
  %v214 = vsub.f32 %v34, %v213
  %215 = vmatpush1.msra.mxu0 %v214
  %216 = vmatprep.subr.mxu0 0.0
  %v217 = vand.u32 %v35, 4294901760
  %v218 = vsub.f32 %v35, %v217
  %219 = vmatpush1.msra.mxu0 %v218
  %220 = vmatprep.subr.mxu0 0.0
  %v221 = vand.u32 %v36, 4294901760
  %v222 = vsub.f32 %v36, %v221
  %223 = vmatpush1.msra.mxu0 %v222
  %224 = vmatprep.subr.mxu0 0.0
  %v225 = vand.u32 %v37, 4294901760
  %v226 = vsub.f32 %v37, %v225
  %227 = vmatpush1.msra.mxu0 %v226
  %228 = vmatprep.subr.mxu0 0.0
  %229 = vmatpush1.msra.mxu0 0.0
  %230 = vmatprep.subr.mxu0 0.0
  %231 = vmatpush1.msra.mxu0 0.0
  %232 = vmatprep.subr.mxu0 0.0
  %233 = vmatpush1.msra.mxu0 0.0
  %234 = vmatprep.subr.mxu0 0.0
  %235 = vmatpush1.msra.mxu0 0.0
  %236 = vmatprep.subr.mxu0 0.0
  %237 = vmatpush1.msra.mxu0 0.0
  %238 = vmatprep.subr.mxu0 0.0
  %239 = vmatpush1.msra.mxu0 0.0
  %240 = vmatprep.subr.mxu0 0.0
  %241 = vmatpush1.msra.mxu0 0.0
  %242 = vmatprep.subr.mxu0 0.0
  %243 = vmatpush1.msra.mxu0 0.0
  %244 = vmatprep.subr.mxu0 0.0
  %245 = vmatpush1.msra.mxu0 0.0
  %246 = vmatprep.subr.mxu0 0.0
  %247 = vmatpush1.msra.mxu0 0.0
  %248 = vmatprep.subr.mxu0 0.0
  %249 = vmatpush1.msra.mxu0 0.0
  %250 = vmatprep.subr.mxu0 0.0
  %251 = vmatpush1.msra.mxu0 0.0
  %252 = vmatprep.subr.mxu0 0.0
  %253 = vmatpush1.msra.mxu0 0.0
  %254 = vmatprep.subr.mxu0 0.0
  %255 = vmatpush1.msra.mxu0 0.0
  %256 = vmatprep.subr.mxu0 0.0
  %257 = vmatpush1.msra.mxu0 0.0
  %258 = vmatprep.subr.mxu0 0.0
  %259 = vmatpush1.msra.mxu0 0.0
  %260 = vmatprep.subr.mxu0 0.0
  %261 = vmatpush1.msra.mxu0 0.0
  %262 = vmatprep.subr.mxu0 0.0
  %263 = vmatpush1.msra.mxu0 0.0
  %264 = vmatprep.subr.mxu0 0.0
  %265 = vmatpush1.msra.mxu0 0.0
  %266 = vmatprep.subr.mxu0 0.0
  %267 = vmatpush1.msra.mxu0 0.0
  %268 = vmatprep.subr.mxu0 0.0
  %269 = vmatpush1.msra.mxu0 0.0
  %270 = vmatprep.subr.mxu0 0.0
  %271 = vmatpush1.msra.mxu0 0.0
  %272 = vmatprep.subr.mxu0 0.0
  %273 = vmatpush1.msra.mxu0 0.0
  %274 = vmatprep.subr.mxu0 0.0
  %275 = vmatpush1.msra.mxu0 0.0
  %276 = vmatprep.subr.mxu0 0.0
  %277 = vmatpush1.msra.mxu0 0.0
  %278 = vmatprep.subr.mxu0 0.0
  %279 = vmatpush1.msra.mxu0 0.0
  %280 = vmatprep.subr.mxu0 0.0
  %281 = vmatpush1.msra.mxu0 0.0
  %282 = vmatprep.subr.mxu0 0.0
  %283 = vmatpush1.msra.mxu0 0.0
  %284 = vmatprep.mubr.f32.mxu0 0.0
  %v285 = vand.u32 %v40, 4294901760
  %v286 = vsub.f32 %v40, %v285
  %287 = vmatmul.mubr.f32.gmra.mrb[0].mxu0 %v286
  %v288 = vpop.f32.mrb[0].mxu0
  %v289 = vadd.f32 %v209, %v288
  %v290 = vpop.f32.mrb[0].mxu0
  %291 = vdwg.mxu0
  %292 = vmatprep.subr.mxu0 0.0
  %v293 = vand.u32 %v34, 4294901760
  %294 = vmatpush1.msra.mxu0 %v293
  %295 = vmatprep.subr.mxu0 0.0
  %v296 = vand.u32 %v35, 4294901760
  %297 = vmatpush1.msra.mxu0 %v296
  %298 = vmatprep.subr.mxu0 0.0
  %v299 = vand.u32 %v36, 4294901760
  %300 = vmatpush1.msra.mxu0 %v299
  %301 = vmatprep.subr.mxu0 0.0
  %v302 = vand.u32 %v37, 4294901760
  %303 = vmatpush1.msra.mxu0 %v302
  %304 = vmatprep.subr.mxu0 0.0
  %305 = vmatpush1.msra.mxu0 0.0
  %306 = vmatprep.subr.mxu0 0.0
  %307 = vmatpush1.msra.mxu0 0.0
  %308 = vmatprep.subr.mxu0 0.0
  %309 = vmatpush1.msra.mxu0 0.0
  %310 = vmatprep.subr.mxu0 0.0
  %311 = vmatpush1.msra.mxu0 0.0
  %312 = vmatprep.subr.mxu0 0.0
  %313 = vmatpush1.msra.mxu0 0.0
  %314 = vmatprep.subr.mxu0 0.0
  %315 = vmatpush1.msra.mxu0 0.0
  %316 = vmatprep.subr.mxu0 0.0
  %317 = vmatpush1.msra.mxu0 0.0
  %318 = vmatprep.subr.mxu0 0.0
  %319 = vmatpush1.msra.mxu0 0.0
  %320 = vmatprep.subr.mxu0 0.0
  %321 = vmatpush1.msra.mxu0 0.0
  %322 = vmatprep.subr.mxu0 0.0
  %323 = vmatpush1.msra.mxu0 0.0
  %324 = vmatprep.subr.mxu0 0.0
  %325 = vmatpush1.msra.mxu0 0.0
  %326 = vmatprep.subr.mxu0 0.0
  %327 = vmatpush1.msra.mxu0 0.0
  %328 = vmatprep.subr.mxu0 0.0
  %329 = vmatpush1.msra.mxu0 0.0
  %330 = vmatprep.subr.mxu0 0.0
  %331 = vmatpush1.msra.mxu0 0.0
  %332 = vmatprep.subr.mxu0 0.0
  %333 = vmatpush1.msra.mxu0 0.0
  %334 = vmatprep.subr.mxu0 0.0
  %335 = vmatpush1.msra.mxu0 0.0
  %336 = vmatprep.subr.mxu0 0.0
  %337 = vmatpush1.msra.mxu0 0.0
  %338 = vmatprep.subr.mxu0 0.0
  %339 = vmatpush1.msra.mxu0 0.0
  %340 = vmatprep.subr.mxu0 0.0
  %341 = vmatpush1.msra.mxu0 0.0
  %342 = vmatprep.subr.mxu0 0.0
  %343 = vmatpush1.msra.mxu0 0.0
  %344 = vmatprep.subr.mxu0 0.0
  %345 = vmatpush1.msra.mxu0 0.0
  %346 = vmatprep.subr.mxu0 0.0
  %347 = vmatpush1.msra.mxu0 0.0
  %348 = vmatprep.subr.mxu0 0.0
  %349 = vmatpush1.msra.mxu0 0.0
  %350 = vmatprep.subr.mxu0 0.0
  %351 = vmatpush1.msra.mxu0 0.0
  %352 = vmatprep.subr.mxu0 0.0
  %353 = vmatpush1.msra.mxu0 0.0
  %354 = vmatprep.subr.mxu0 0.0
  %355 = vmatpush1.msra.mxu0 0.0
  %356 = vmatprep.subr.mxu0 0.0
  %357 = vmatpush1.msra.mxu0 0.0
  %358 = vmatprep.subr.mxu0 0.0
  %359 = vmatpush1.msra.mxu0 0.0
  %360 = vmatprep.mubr.f32.mxu0 0.0
  %v361 = vand.u32 %v40, 4294901760
  %v362 = vsub.f32 %v40, %v361
  %v363 = vand.u32 %v362, 4294901760
  %364 = vmatmul.mubr.f32.gmra.mrb[0].mxu0 %v363
  %v365 = vpop.f32.mrb[0].mxu0
  %v366 = vadd.f32 %v289, %v365
  %v367 = vpop.f32.mrb[0].mxu0
  %368 = vdwg.mxu0
  %369 = vmatprep.subr.mxu0 0.0
  %v370 = vand.u32 %v34, 4294901760
  %v371 = vsub.f32 %v34, %v370
  %v372 = vand.u32 %v371, 4294901760
  %373 = vmatpush1.msra.mxu0 %v372
  %374 = vmatprep.subr.mxu0 0.0
  %v375 = vand.u32 %v35, 4294901760
  %v376 = vsub.f32 %v35, %v375
  %v377 = vand.u32 %v376, 4294901760
  %378 = vmatpush1.msra.mxu0 %v377
  %379 = vmatprep.subr.mxu0 0.0
  %v380 = vand.u32 %v36, 4294901760
  %v381 = vsub.f32 %v36, %v380
  %v382 = vand.u32 %v381, 4294901760
  %383 = vmatpush1.msra.mxu0 %v382
  %384 = vmatprep.subr.mxu0 0.0
  %v385 = vand.u32 %v37, 4294901760
  %v386 = vsub.f32 %v37, %v385
  %v387 = vand.u32 %v386, 4294901760
  %388 = vmatpush1.msra.mxu0 %v387
  %389 = vmatprep.subr.mxu0 0.0
  %390 = vmatpush1.msra.mxu0 0.0
  %391 = vmatprep.subr.mxu0 0.0
  %392 = vmatpush1.msra.mxu0 0.0
  %393 = vmatprep.subr.mxu0 0.0
  %394 = vmatpush1.msra.mxu0 0.0
  %395 = vmatprep.subr.mxu0 0.0
  %396 = vmatpush1.msra.mxu0 0.0
  %397 = vmatprep.subr.mxu0 0.0
  %398 = vmatpush1.msra.mxu0 0.0
  %399 = vmatprep.subr.mxu0 0.0
  %400 = vmatpush1.msra.mxu0 0.0
  %401 = vmatprep.subr.mxu0 0.0
  %402 = vmatpush1.msra.mxu0 0.0
  %403 = vmatprep.subr.mxu0 0.0
  %404 = vmatpush1.msra.mxu0 0.0
  %405 = vmatprep.subr.mxu0 0.0
  %406 = vmatpush1.msra.mxu0 0.0
  %407 = vmatprep.subr.mxu0 0.0
  %408 = vmatpush1.msra.mxu0 0.0
  %409 = vmatprep.subr.mxu0 0.0
  %410 = vmatpush1.msra.mxu0 0.0
  %411 = vmatprep.subr.mxu0 0.0
  %412 = vmatpush1.msra.mxu0 0.0
  %413 = vmatprep.subr.mxu0 0.0
  %414 = vmatpush1.msra.mxu0 0.0
  %415 = vmatprep.subr.mxu0 0.0
  %416 = vmatpush1.msra.mxu0 0.0
  %417 = vmatprep.subr.mxu0 0.0
  %418 = vmatpush1.msra.mxu0 0.0
  %419 = vmatprep.subr.mxu0 0.0
  %420 = vmatpush1.msra.mxu0 0.0
  %421 = vmatprep.subr.mxu0 0.0
  %422 = vmatpush1.msra.mxu0 0.0
  %423 = vmatprep.subr.mxu0 0.0
  %424 = vmatpush1.msra.mxu0 0.0
  %425 = vmatprep.subr.mxu0 0.0
  %426 = vmatpush1.msra.mxu0 0.0
  %427 = vmatprep.subr.mxu0 0.0
  %428 = vmatpush1.msra.mxu0 0.0
  %429 = vmatprep.subr.mxu0 0.0
  %430 = vmatpush1.msra.mxu0 0.0
  %431 = vmatprep.subr.mxu0 0.0
  %432 = vmatpush1.msra.mxu0 0.0
  %433 = vmatprep.subr.mxu0 0.0
  %434 = vmatpush1.msra.mxu0 0.0
  %435 = vmatprep.subr.mxu0 0.0
  %436 = vmatpush1.msra.mxu0 0.0
  %437 = vmatprep.subr.mxu0 0.0
  %438 = vmatpush1.msra.mxu0 0.0
  %439 = vmatprep.subr.mxu0 0.0
  %440 = vmatpush1.msra.mxu0 0.0
  %441 = vmatprep.subr.mxu0 0.0
  %442 = vmatpush1.msra.mxu0 0.0
  %443 = vmatprep.subr.mxu0 0.0
  %444 = vmatpush1.msra.mxu0 0.0
  %445 = vmatprep.mubr.f32.mxu0 0.0
  %v446 = vand.u32 %v40, 4294901760
  %447 = vmatmul.mubr.f32.gmra.mrb[0].mxu0 %v446
  %v448 = vpop.f32.mrb[0].mxu0
  %v449 = vadd.f32 %v366, %v448
  %v450 = vpop.f32.mrb[0].mxu0
  %451 = vdwg.mxu0
  %452 = vmatprep.subr.mxu0 0.0
  %v453 = vand.u32 %v34, 4294901760
  %454 = vmatpush1.msra.mxu0 %v453
  %455 = vmatprep.subr.mxu0 0.0
  %v456 = vand.u32 %v35, 4294901760
  %457 = vmatpush1.msra.mxu0 %v456
  %458 = vmatprep.subr.mxu0 0.0
  %v459 = vand.u32 %v36, 4294901760
  %460 = vmatpush1.msra.mxu0 %v459
  %461 = vmatprep.subr.mxu0 0.0
  %v462 = vand.u32 %v37, 4294901760
  %463 = vmatpush1.msra.mxu0 %v462
  %464 = vmatprep.subr.mxu0 0.0
  %465 = vmatpush1.msra.mxu0 0.0
  %466 = vmatprep.subr.mxu0 0.0
  %467 = vmatpush1.msra.mxu0 0.0
  %468 = vmatprep.subr.mxu0 0.0
  %469 = vmatpush1.msra.mxu0 0.0
  %470 = vmatprep.subr.mxu0 0.0
  %471 = vmatpush1.msra.mxu0 0.0
  %472 = vmatprep.subr.mxu0 0.0
  %473 = vmatpush1.msra.mxu0 0.0
  %474 = vmatprep.subr.mxu0 0.0
  %475 = vmatpush1.msra.mxu0 0.0
  %476 = vmatprep.subr.mxu0 0.0
  %477 = vmatpush1.msra.mxu0 0.0
  %478 = vmatprep.subr.mxu0 0.0
  %479 = vmatpush1.msra.mxu0 0.0
  %480 = vmatprep.subr.mxu0 0.0
  %481 = vmatpush1.msra.mxu0 0.0
  %482 = vmatprep.subr.mxu0 0.0
  %483 = vmatpush1.msra.mxu0 0.0
  %484 = vmatprep.subr.mxu0 0.0
  %485 = vmatpush1.msra.mxu0 0.0
  %486 = vmatprep.subr.mxu0 0.0
  %487 = vmatpush1.msra.mxu0 0.0
  %488 = vmatprep.subr.mxu0 0.0
  %489 = vmatpush1.msra.mxu0 0.0
  %490 = vmatprep.subr.mxu0 0.0
  %491 = vmatpush1.msra.mxu0 0.0
  %492 = vmatprep.subr.mxu0 0.0
  %493 = vmatpush1.msra.mxu0 0.0
  %494 = vmatprep.subr.mxu0 0.0
  %495 = vmatpush1.msra.mxu0 0.0
  %496 = vmatprep.subr.mxu0 0.0
  %497 = vmatpush1.msra.mxu0 0.0
  %498 = vmatprep.subr.mxu0 0.0
  %499 = vmatpush1.msra.mxu0 0.0
  %500 = vmatprep.subr.mxu0 0.0
  %501 = vmatpush1.msra.mxu0 0.0
  %502 = vmatprep.subr.mxu0 0.0
  %503 = vmatpush1.msra.mxu0 0.0
  %504 = vmatprep.subr.mxu0 0.0
  %505 = vmatpush1.msra.mxu0 0.0
  %506 = vmatprep.subr.mxu0 0.0
  %507 = vmatpush1.msra.mxu0 0.0
  %508 = vmatprep.subr.mxu0 0.0
  %509 = vmatpush1.msra.mxu0 0.0
  %510 = vmatprep.subr.mxu0 0.0
  %511 = vmatpush1.msra.mxu0 0.0
  %512 = vmatprep.subr.mxu0 0.0
  %513 = vmatpush1.msra.mxu0 0.0
  %514 = vmatprep.subr.mxu0 0.0
  %515 = vmatpush1.msra.mxu0 0.0
  %516 = vmatprep.subr.mxu0 0.0
  %517 = vmatpush1.msra.mxu0 0.0
  %518 = vmatprep.subr.mxu0 0.0
  %519 = vmatpush1.msra.mxu0 0.0
  %520 = vmatprep.mubr.f32.mxu0 0.0
  %v521 = vand.u32 %v40, 4294901760
  %522 = vmatmul.mubr.f32.gmra.mrb[0].mxu0 %v521
  %v523 = vpop.f32.mrb[0].mxu0
  %v524 = vadd.f32 %v449, %v523
  %v525 = vpop.f32.mrb[0].mxu0
  %526 = vdwg.mxu0
  %v527 = vmax.f32 %v524, 1.0
  %v528 = vsub.f32 %v527, 1.0
  %v529 = vadd.f32 %v527, 1.0
  %v530 = vmul.f32 %v528, %v529
  %v531 = vrsqrt.pop %v530
  %v532 = vmul.f32 %v530, %v531
  %vm533 = vcmp.eq.f32.partialorder %v530, inf
  %v534 = vsel %vm533, %v530, %v532
  %vm535 = vcmp.eq.f32.partialorder %v530, 0.0
  %v536 = vand.u32 %v530, 2147483648
  %v537 = vsel %vm535, %v536, %v534
  %v538 = vadd.f32 %v527, %v537
  %v539 = vlog2.pop %v538
  %v540 = vmul.f32 %v539, 0.6931472
  %v541 = vld [vmem:[#allocation2] sm:$0x1]
  %v542 = vadd.f32 %v541, %v540
  %543 = vst [vmem:[#allocation2] sm:$0x1] %v542
  // Predicated region
  $region14: #{model_forward.1} parent=0 // pred_check
    %p544 = pneg %p28
  $region15: #{model_forward.1} parent=0 // pred_check_branch
    %546 = sbr.rel (%p544) target = $region17
  $region16: #{model_forward.1} parent=0 // pred_region
    %v547 = vld [vmem:[#allocation2] sm:$0x1]
    %vm548 = vcmask 1040384
    %v549 = vsel %vm548, %v547, 0.0
    %550 = vadd.xlane.f32.xlu0 %v549
    %v551 = vpop.xlane.xlu0 %550
    %v552 = vrot.slane %v551, 4
    %v553 = vadd.f32 %v551, %v552
    %v554 = vrot.slane %v553, 2
    %v555 = vadd.f32 %v553, %v554
    %v556 = vrot.slane %v555, 1
    %v557 = vadd.f32 %v555, %v556
    %s558 = vtos %v557
    %v559 = vstv %s558
    %v560 = vadd.f32 %v559, 0.0
    %561 = vst [vmem:[%s2] sm:$0xff] %v560
  $region17: #{model_forward.1} parent=0 // pred_fallthru
    _
  // Predicated region
  $region18: #{model_forward.1} parent=0 // pred_check
    _
  $region19: #{model_forward.1} parent=0 // pred_check_branch
    %563 = sbr.rel (0) target = $region21
  $region20: #{model_forward.1} parent=0 // pred_region
    _
  $region21: #{model_forward.1} parent=0 // pred_fallthru
    _
  // Predicated region
  $region22: #{model_forward.1} parent=0 // pred_check
    _
  $region23: #{model_forward.1} parent=0 // pred_check_branch
    %565 = sbr.rel (0) target = $region25
  $region24: #{model_forward.1} parent=0 // pred_region
    _
  $region25: #{model_forward.1} parent=0 // pred_fallthru
    _

</llo_original>
